<compile_context>
chip_gen: v7x
topology: tpu7x:2x2x1
jax: 0.10.0
libtpu: 0.0.40
codegen_flags: <defaults>
</compile_context>

<pallas_src>
import math
from functools import partial

import jax
import jax.numpy as jnp
from jax import lax
from jax.experimental import pallas as pl
from jax.experimental.pallas import tpu as pltpu


# --------------------------------------------------------------------------- #
# Helpers: VMEM budget / tile selection
# --------------------------------------------------------------------------- #
def _roundup(x, m):
    return ((x + m - 1) // m) * m


def _vmem_capacity_bytes():
    """Per-core VMEM capacity; conservative 64 MiB fallback (v7x floor)."""
    try:
        info = pltpu.get_tpu_info()
        cap = getattr(info, "vmem_capacity_bytes", None)
        if cap:
            return int(cap)
    except Exception:
        pass
    return 64 * 1024 * 1024


def _fixed_vmem_bytes(L, d_model, d_qkv, kv_bytes, w_bytes):
    """Double-buffered projected-K/V blocks + weights + biases (lane-padded)."""
    kv = 2 * 2 * _roundup(L, 8) * _roundup(d_qkv, 128) * kv_bytes
    w = 2 * (_roundup(d_model, 8) * _roundup(d_qkv, 128)
             + _roundup(d_qkv, 8) * _roundup(d_model, 128)) * w_bytes
    b = 2 * (_roundup(d_qkv, 128) + _roundup(d_model, 128)) * 8 * 4
    return kv + w + b


def _per_step_vmem_bytes(tq, L, d_model, mask_bytes, attn_bytes):
    """Double-buffered per-grid-step blocks: q in, out, mask in, attn out."""
    q_out = 2 * 2 * _roundup(tq, 8) * _roundup(d_model, 128) * 4
    ma = 2 * _roundup(tq, 8) * _roundup(L, 128) * (mask_bytes + attn_bytes)
    return q_out + ma


def _choose_q_tile(L, d_model, mask_bytes, attn_bytes, fixed_bytes, budget):
    """Largest query tile (preferring multiples of 128) that divides L and fits."""
    if L <= 128:
        return L
    cands = [t for t in (512, 384, 256, 128) if t <= L and L % t == 0]
    if not cands:
        cands = [t for t in range(min(512, L), 7, -8) if L % t == 0]
    if not cands:
        cands = [L]  # fallback: no tiling (only hit for awkward/prime L)
    for t in cands:
        if fixed_bytes + _per_step_vmem_bytes(t, L, d_model,
                                              mask_bytes, attn_bytes) <= budget:
            return t
    return cands[-1]


# --------------------------------------------------------------------------- #
# Kernel
# --------------------------------------------------------------------------- #
def _period_attention_kernel(
    q_ref, k_ref, v_ref, mask_ref,
    wq_ref, bq_ref, wo_ref, bo_ref,
    out_ref, attn_ref,
    *, scale, compute_dtype,
):
    # Q projection for this query tile (d_model -> d_qkv); weights pre-cast.
    q = (jnp.dot(q_ref[0].astype(compute_dtype), wq_ref[...],
                 preferred_element_type=jnp.float32) + bq_ref[...]
         ).astype(compute_dtype)                                     # (TQ, d_qkv)

    # Scaled dot-product attention (contract last dims; no K transpose).
    scores = lax.dot_general(
        q, k_ref[0], (((1,), (1,)), ((), ())),
        preferred_element_type=jnp.float32) * scale                  # (TQ, L)
    scores = scores + mask_ref[0].astype(jnp.float32)

    # Numerically stable softmax in f32.  Exact reciprocal (vector is only
    # (TQ, 1)) so returned attention rows sum to 1.
    m = jnp.max(scores, axis=-1, keepdims=True)
    p = jnp.exp(scores - m)
    attn = p * pl.reciprocal(jnp.sum(p, axis=-1, keepdims=True), approx=False)

    ctx = jnp.dot(attn.astype(compute_dtype), v_ref[0],
                  preferred_element_type=jnp.float32)                # (TQ, d_qkv)

    # Output projection d_qkv -> d_model.
    out = jnp.dot(ctx.astype(compute_dtype), wo_ref[...],
                  preferred_element_type=jnp.float32) + bo_ref[...]  # (TQ, d_model)

    out_ref[0] = out.astype(out_ref.dtype)
    attn_ref[0] = attn.astype(attn_ref.dtype)


# --------------------------------------------------------------------------- #
# Wrapper
# --------------------------------------------------------------------------- #
def period_attention_layer(queries, keys, values, attn_mask, params,
                           *, use_bf16=True, q_tile=None):
    """queries/keys/values: [B, L, d_model] f32.
    attn_mask: additive float mask, shape [B, L, L], [1, L, L] or [L, L].
    Returns (out [B, L, d_model] f32, attn [B, L, L] (bf16 if use_bf16 else f32)).
    """
    B, L, d_model = queries.shape
    d_qkv = params["wq"].shape[1]
    compute_dtype = jnp.bfloat16 if use_bf16 else jnp.float32
    cb = jnp.dtype(compute_dtype).itemsize
    f32b = 4

    # --- Hoisted K/V projections (plain XLA) fed to the kernel pre-projected. ---
    k_proj = (keys @ params["wk"] + params["bk"]).astype(compute_dtype)    # (B, L, d_qkv)
    v_proj = (values @ params["wv"] + params["bv"]).astype(compute_dtype)  # (B, L, d_qkv)

    # --- Weights pre-cast once on the host; biases stay f32 (added post-acc). ---
    wq = params["wq"].astype(compute_dtype)
    wo = params["wo"].astype(compute_dtype)
    bq = params["bq"].astype(jnp.float32)
    bo = params["bo"].astype(jnp.float32)

    # --- Mask: allow batch-invariant (1, L, L) / (L, L) masks. ---
    if attn_mask.ndim == 2:
        attn_mask = attn_mask[None]
    mask = attn_mask.astype(compute_dtype if use_bf16 else jnp.float32)
    mask_batched = mask.shape[0] != 1
    attn_dtype = compute_dtype if use_bf16 else jnp.float32
    mask_bytes = jnp.dtype(mask.dtype).itemsize
    attn_bytes = jnp.dtype(attn_dtype).itemsize

    # --- Generation-aware VMEM budget and query-tile selection. ---
    budget = (_vmem_capacity_bytes() * 7) // 8       # ~56 MiB v7x, ~112 MiB v5e/v6e
    fixed = _fixed_vmem_bytes(L, d_model, d_qkv, cb, cb)
    TQ = q_tile if q_tile is not None else _choose_q_tile(
        L, d_model, mask_bytes, attn_bytes, fixed, budget)
    assert L % TQ == 0 and (TQ % 8 == 0 or TQ == L), "bad query tile"
    n_q = L // TQ

    need = fixed + _per_step_vmem_bytes(TQ, L, d_model, mask_bytes, attn_bytes)
    vmem_limit = int(min(max(need * 3 // 2, 32 * 1024 * 1024), budget))

    mask_index_map = ((lambda b, qi: (b, qi, 0)) if mask_batched
                      else (lambda b, qi: (0, qi, 0)))

    in_specs = [
        pl.BlockSpec((1, TQ, d_model), lambda b, qi: (b, qi, 0)),   # queries (tiled)
        pl.BlockSpec((1, L, d_qkv), lambda b, qi: (b, 0, 0)),       # projected keys
        pl.BlockSpec((1, L, d_qkv), lambda b, qi: (b, 0, 0)),       # projected values
        pl.BlockSpec((1, TQ, L), mask_index_map),                   # additive mask
        pl.BlockSpec((d_model, d_qkv), lambda b, qi: (0, 0)),       # Wq^T
        pl.BlockSpec((1, d_qkv), lambda b, qi: (0, 0)),             # bq
        pl.BlockSpec((d_qkv, d_model), lambda b, qi: (0, 0)),       # Wo^T
        pl.BlockSpec((1, d_model), lambda b, qi: (0, 0)),           # bo
    ]
    out_specs = [
        pl.BlockSpec((1, TQ, d_model), lambda b, qi: (b, qi, 0)),   # out
        pl.BlockSpec((1, TQ, L), lambda b, qi: (b, qi, 0)),         # attn
    ]

    flops = int(
        2 * B * L * d_model * d_qkv          # Q projection (per-tile, in-kernel)
        + 2 * 2 * B * L * L * d_qkv          # scores + context matmuls
        + 2 * B * L * d_qkv * d_model        # output projection
    )
    transcendentals = int(B * L * L)
    bytes_accessed = int(
        B * L * d_model * f32b               # queries
        + 2 * B * L * d_qkv * cb             # projected K, V
        + mask.shape[0] * L * L * mask_bytes # mask (once if batch-invariant)
        + 2 * d_model * d_qkv * cb           # Wq, Wo
        + (d_qkv + d_model) * f32b           # biases
        + B * L * d_model * f32b             # out
        + B * L * L * attn_bytes             # attn
    )

    out, attn = pl.pallas_call(
        partial(_period_attention_kernel,
                scale=1.0 / math.sqrt(d_qkv),
                compute_dtype=compute_dtype),
        grid_spec=pltpu.PrefetchScalarGridSpec(
            num_scalar_prefetch=0,
            grid=(B, n_q),
            in_specs=in_specs,
            out_specs=out_specs,
        ),
        out_shape=(
            jax.ShapeDtypeStruct((B, L, d_model), jnp.float32),
            jax.ShapeDtypeStruct((B, L, L), attn_dtype),
        ),
        compiler_params=pltpu.CompilerParams(
            dimension_semantics=("parallel", "parallel"),
            vmem_limit_bytes=vmem_limit,
        ),
        cost_estimate=pl.CostEstimate(
            flops=flops,
            transcendentals=transcendentals,
            bytes_accessed=bytes_accessed,
        ),
    )(queries, k_proj, v_proj, mask, wq, bq, wo, bo)
    return out, attn


# --------------------------------------------------------------------------- #
# Reference + test harness
# --------------------------------------------------------------------------- #
def _reference(queries, keys, values, attn_mask, params):
    q = queries @ params["wq"] + params["bq"]
    k = keys @ params["wk"] + params["bk"]
    v = values @ params["wv"] + params["bv"]
    d_qkv = q.shape[-1]
    if attn_mask.ndim == 2:
        attn_mask = attn_mask[None]
    scores = jnp.einsum("bld,bmd->blm", q, k) / math.sqrt(d_qkv) + attn_mask
    attn = jax.nn.softmax(scores, axis=-1)
    ctx = jnp.einsum("blm,bmd->bld", attn, v)
    out = ctx @ params["wo"] + params["bo"]
    return out, attn


def init_params(key, d_model, n_heads):
    d_qkv = d_model // n_heads
    ks = jax.random.split(key, 8)

    def lin(kw, kb, fan_in, fan_out):
        bound = 1.0 / math.sqrt(fan_in)
        # stored pre-transposed: (fan_in, fan_out), biases as (1, fan_out)
        w = jax.random.uniform(kw, (fan_in, fan_out), jnp.float32, -bound, bound)
        b = jax.random.uniform(kb, (1, fan_out), jnp.float32, -bound, bound)
        return w, b

    wq, bq = lin(ks[0], ks[1], d_model, d_qkv)
    wk, bk = lin(ks[2], ks[3], d_model, d_qkv)
    wv, bv = lin(ks[4], ks[5], d_model, d_qkv)
    wo, bo = lin(ks[6], ks[7], d_qkv, d_model)
    return dict(wq=wq, bq=bq, wk=wk, bk=bk, wv=wv, bv=bv, wo=wo, bo=bo)


def _run_case(B, L, d_model, n_heads, seed, mask_kind="zero", q_tile=None):
    root = jax.random.PRNGKey(seed)
    kq, kk, kv, kp = jax.random.split(root, 4)
    queries = jax.random.normal(kq, (B, L, d_model), jnp.float32)
    keys = jax.random.normal(kk, (B, L, d_model), jnp.float32)
    values = jax.random.normal(kv, (B, L, d_model), jnp.float32)
    if mask_kind == "causal":
        # batch-invariant additive mask, shape (1, L, L)
        causal = jnp.where(jnp.tril(jnp.ones((L, L), jnp.bool_)), 0.0, -1e9)
        attn_mask = causal[None].astype(jnp.float32)
    else:
        attn_mask = jnp.zeros((B, L, L), jnp.float32)
    params = init_params(kp, d_model, n_heads)

    ref_out, ref_attn = _reference(queries, keys, values, attn_mask, params)

    # Exact f32 path — tight tolerance.
    out, attn = period_attention_layer(queries, keys, values, attn_mask, params,
                                       use_bf16=False, q_tile=q_tile)
    out = jax.block_until_ready(out)
    attn = jax.block_until_ready(attn)
    assert jnp.allclose(out, ref_out, atol=1e-4, rtol=1e-4), "f32 output mismatch"
    assert jnp.allclose(attn, ref_attn, atol=1e-4, rtol=1e-4), "f32 attn mismatch"

    # bf16 MXU-operand path (f32 accumulation, bf16 mask/attn) — loose tolerance.
    out_b, attn_b = period_attention_layer(queries, keys, values, attn_mask, params,
                                           use_bf16=True, q_tile=q_tile)
    out_b = jax.block_until_ready(out_b)
    attn_b = jax.block_until_ready(attn_b)
    assert jnp.allclose(out_b, ref_out, atol=1e-1, rtol=1e-1), "bf16 output mismatch"
    assert jnp.allclose(attn_b.astype(jnp.float32), ref_attn,
                        atol=1e-1, rtol=1e-1), "bf16 attn mismatch"


if __name__ == "__main__":
    # Small base case (matches the module's natural small shapes).
    _run_case(B=2, L=16, d_model=32, n_heads=4, seed=0, mask_kind="zero")
    # Tiled case: exercises the query-tile grid axis (n_q > 1) + a
    # batch-invariant causal mask (broadcast index_map path).
    _run_case(B=2, L=64, d_model=64, n_heads=8, seed=1, mask_kind="causal", q_tile=32)
    print("KERNEL_OK")
</pallas_src>

<mosaic_0001>
module attributes {stable_mosaic.version = 11 : i64} {
  func.func @_period_attention_kernel(%arg0: i32, %arg1: i32, %arg2: memref<1x16x32xf32, #tpu.memory_space<vmem>>, %arg3: memref<1x16x8xf32, #tpu.memory_space<vmem>>, %arg4: memref<1x16x8xf32, #tpu.memory_space<vmem>>, %arg5: memref<1x16x16xf32, #tpu.memory_space<vmem>>, %arg6: memref<32x8xf32, #tpu.memory_space<vmem>>, %arg7: memref<1x8xf32, #tpu.memory_space<vmem>>, %arg8: memref<8x32xf32, #tpu.memory_space<vmem>>, %arg9: memref<1x32xf32, #tpu.memory_space<vmem>>, %arg10: memref<1x16x32xf32, #tpu.memory_space<vmem>>, %arg11: memref<1x16x16xf32, #tpu.memory_space<vmem>>) attributes {dimension_semantics = [#tpu.dimension_semantics<parallel>, #tpu.dimension_semantics<parallel>], iteration_bounds = array<i64: 2, 1>, scalar_prefetch = 0 : i64, scratch_operands = 0 : i64, tpu.core_type = #tpu.core_type<tc>, window_params = [{transform_indices = @transform_0, window_bounds = array<i64: 1, 16, 32>}, {transform_indices = @transform_1, window_bounds = array<i64: 1, 16, 8>}, {transform_indices = @transform_2, window_bounds = array<i64: 1, 16, 8>}, {transform_indices = @transform_3, window_bounds = array<i64: 1, 16, 16>}, {pipeline_mode = #tpu.pipeline_mode<synchronous>, transform_indices = @transform_4, window_bounds = array<i64: 32, 8>}, {pipeline_mode = #tpu.pipeline_mode<synchronous>, transform_indices = @transform_5, window_bounds = array<i64: 1, 8>}, {pipeline_mode = #tpu.pipeline_mode<synchronous>, transform_indices = @transform_6, window_bounds = array<i64: 8, 32>}, {pipeline_mode = #tpu.pipeline_mode<synchronous>, transform_indices = @transform_7, window_bounds = array<i64: 1, 32>}, {transform_indices = @transform_8, window_bounds = array<i64: 1, 16, 32>}, {transform_indices = @transform_9, window_bounds = array<i64: 1, 16, 16>}]} {
    %c0 = arith.constant 0 : index
    %c0_0 = arith.constant 0 : index
    %c0_1 = arith.constant 0 : index
    %0 = vector.load %arg2[%c0, %c0_0, %c0_1] : memref<1x16x32xf32, #tpu.memory_space<vmem>>, vector<1x16x32xf32>
    %1 = vector.shape_cast %0 : vector<1x16x32xf32> to vector<16x32xf32>
    %c0_2 = arith.constant 0 : index
    %c0_3 = arith.constant 0 : index
    %2 = vector.load %arg6[%c0_2, %c0_3] : memref<32x8xf32, #tpu.memory_space<vmem>>, vector<32x8xf32>
    %cst = arith.constant dense<0.000000e+00> : vector<16x8xf32>
    %3 = tpu.matmul %1, %2, %cst {dimension_numbers = #tpu.dot_dimension_numbers<[1], [0], [0], [1], [0, 0, 1, 1], [], []>} : vector<16x32xf32>, vector<32x8xf32>, vector<16x8xf32> -> vector<16x8xf32>
    %c0_4 = arith.constant 0 : index
    %c0_5 = arith.constant 0 : index
    %4 = vector.load %arg7[%c0_4, %c0_5] : memref<1x8xf32, #tpu.memory_space<vmem>>, vector<1x8xf32>
    %5 = vector.broadcast %4 : vector<1x8xf32> to vector<16x8xf32>
    %6 = arith.addf %3, %5 : vector<16x8xf32>
    %c0_6 = arith.constant 0 : index
    %c0_7 = arith.constant 0 : index
    %c0_8 = arith.constant 0 : index
    %7 = vector.load %arg3[%c0_6, %c0_7, %c0_8] : memref<1x16x8xf32, #tpu.memory_space<vmem>>, vector<1x16x8xf32>
    %8 = vector.shape_cast %7 : vector<1x16x8xf32> to vector<16x8xf32>
    %cst_9 = arith.constant dense<0.000000e+00> : vector<16x16xf32>
    %9 = tpu.matmul %6, %8, %cst_9 {dimension_numbers = #tpu.dot_dimension_numbers<[1], [1], [0], [0], [0, 0, 1, 0], [], []>} : vector<16x8xf32>, vector<16x8xf32>, vector<16x16xf32> -> vector<16x16xf32>
    %cst_10 = arith.constant 0.353553385 : f32
    %10 = vector.broadcast %cst_10 : f32 to vector<16x16xf32>
    %11 = arith.mulf %9, %10 : vector<16x16xf32>
    %c0_11 = arith.constant 0 : index
    %c0_12 = arith.constant 0 : index
    %c0_13 = arith.constant 0 : index
    %12 = vector.load %arg5[%c0_11, %c0_12, %c0_13] : memref<1x16x16xf32, #tpu.memory_space<vmem>>, vector<1x16x16xf32>
    %13 = vector.shape_cast %12 : vector<1x16x16xf32> to vector<16x16xf32>
    %14 = arith.addf %11, %13 : vector<16x16xf32>
    %cst_14 = arith.constant dense<0xFF800000> : vector<16xf32>
    %15 = vector.multi_reduction <maximumf>, %14, %cst_14 [1] : vector<16x16xf32> to vector<16xf32>
    %16 = vector.shape_cast %15 : vector<16xf32> to vector<16x1xf32>
    %17 = vector.broadcast %16 : vector<16x1xf32> to vector<16x16xf32>
    %18 = arith.subf %14, %17 : vector<16x16xf32>
    %19 = math.exp %18 : vector<16x16xf32>
    %cst_15 = arith.constant dense<0.000000e+00> : vector<16xf32>
    %20 = vector.multi_reduction <add>, %19, %cst_15 [1] : vector<16x16xf32> to vector<16xf32>
    %21 = vector.shape_cast %20 : vector<16xf32> to vector<16x1xf32>
    %22 = tpu.reciprocal %21 : vector<16x1xf32> -> vector<16x1xf32>
    %23 = vector.broadcast %22 : vector<16x1xf32> to vector<16x16xf32>
    %24 = arith.mulf %19, %23 : vector<16x16xf32>
    %c0_16 = arith.constant 0 : index
    %c0_17 = arith.constant 0 : index
    %c0_18 = arith.constant 0 : index
    %25 = vector.load %arg4[%c0_16, %c0_17, %c0_18] : memref<1x16x8xf32, #tpu.memory_space<vmem>>, vector<1x16x8xf32>
    %26 = vector.shape_cast %25 : vector<1x16x8xf32> to vector<16x8xf32>
    %cst_19 = arith.constant dense<0.000000e+00> : vector<16x8xf32>
    %27 = tpu.matmul %24, %26, %cst_19 {dimension_numbers = #tpu.dot_dimension_numbers<[1], [0], [0], [1], [0, 0, 1, 1], [], []>} : vector<16x16xf32>, vector<16x8xf32>, vector<16x8xf32> -> vector<16x8xf32>
    %c0_20 = arith.constant 0 : index
    %c0_21 = arith.constant 0 : index
    %28 = vector.load %arg8[%c0_20, %c0_21] : memref<8x32xf32, #tpu.memory_space<vmem>>, vector<8x32xf32>
    %cst_22 = arith.constant dense<0.000000e+00> : vector<16x32xf32>
    %29 = tpu.matmul %27, %28, %cst_22 {dimension_numbers = #tpu.dot_dimension_numbers<[1], [0], [0], [1], [0, 0, 1, 1], [], []>} : vector<16x8xf32>, vector<8x32xf32>, vector<16x32xf32> -> vector<16x32xf32>
    %c0_23 = arith.constant 0 : index
    %c0_24 = arith.constant 0 : index
    %30 = vector.load %arg9[%c0_23, %c0_24] : memref<1x32xf32, #tpu.memory_space<vmem>>, vector<1x32xf32>
    %31 = vector.broadcast %30 : vector<1x32xf32> to vector<16x32xf32>
    %32 = arith.addf %29, %31 : vector<16x32xf32>
    %c0_25 = arith.constant 0 : index
    %c0_26 = arith.constant 0 : index
    %c0_27 = arith.constant 0 : index
    %33 = vector.load %arg10[%c0_25, %c0_26, %c0_27] : memref<1x16x32xf32, #tpu.memory_space<vmem>>, vector<1x16x32xf32>
    %34 = vector.shape_cast %33 : vector<1x16x32xf32> to vector<16x32xf32>
    %35 = vector.shape_cast %32 : vector<16x32xf32> to vector<1x16x32xf32>
    tpu.vector_store %arg10[%c0_25, %c0_26, %c0_27], %35 {strides = array<i32>} : memref<1x16x32xf32, #tpu.memory_space<vmem>>, vector<1x16x32xf32>,
    %c0_28 = arith.constant 0 : index
    %c0_29 = arith.constant 0 : index
    %c0_30 = arith.constant 0 : index
    %36 = vector.load %arg11[%c0_28, %c0_29, %c0_30] : memref<1x16x16xf32, #tpu.memory_space<vmem>>, vector<1x16x16xf32>
    %37 = vector.shape_cast %36 : vector<1x16x16xf32> to vector<16x16xf32>
    %38 = vector.shape_cast %24 : vector<16x16xf32> to vector<1x16x16xf32>
    tpu.vector_store %arg11[%c0_28, %c0_29, %c0_30], %38 {strides = array<i32>} : memref<1x16x16xf32, #tpu.memory_space<vmem>>, vector<1x16x16xf32>,
    return
  }
  func.func @transform_0(%arg0: i32, %arg1: i32) -> (i32, i32, i32) {
    %c0_i32 = arith.constant 0 : i32
    %c0_i32_0 = arith.constant 0 : i32
    return %arg0, %arg1, %c0_i32 : i32, i32, i32
  }
  func.func @transform_1(%arg0: i32, %arg1: i32) -> (i32, i32, i32) {
    %c0_i32 = arith.constant 0 : i32
    %c0_i32_0 = arith.constant 0 : i32
    %c0_i32_1 = arith.constant 0 : i32
    return %arg0, %c0_i32, %c0_i32_0 : i32, i32, i32
  }
  func.func @transform_2(%arg0: i32, %arg1: i32) -> (i32, i32, i32) {
    %c0_i32 = arith.constant 0 : i32
    %c0_i32_0 = arith.constant 0 : i32
    %c0_i32_1 = arith.constant 0 : i32
    return %arg0, %c0_i32, %c0_i32_0 : i32, i32, i32
  }
  func.func @transform_3(%arg0: i32, %arg1: i32) -> (i32, i32, i32) {
    %c0_i32 = arith.constant 0 : i32
    %c0_i32_0 = arith.constant 0 : i32
    return %arg0, %arg1, %c0_i32 : i32, i32, i32
  }
  func.func @transform_4(%arg0: i32, %arg1: i32) -> (i32, i32) {
    %c0_i32 = arith.constant 0 : i32
    %c0_i32_0 = arith.constant 0 : i32
    %c0_i32_1 = arith.constant 0 : i32
    return %c0_i32, %c0_i32_0 : i32, i32
  }
  func.func @transform_5(%arg0: i32, %arg1: i32) -> (i32, i32) {
    %c0_i32 = arith.constant 0 : i32
    %c0_i32_0 = arith.constant 0 : i32
    %c0_i32_1 = arith.constant 0 : i32
    return %c0_i32, %c0_i32_0 : i32, i32
  }
  func.func @transform_6(%arg0: i32, %arg1: i32) -> (i32, i32) {
    %c0_i32 = arith.constant 0 : i32
    %c0_i32_0 = arith.constant 0 : i32
    %c0_i32_1 = arith.constant 0 : i32
    return %c0_i32, %c0_i32_0 : i32, i32
  }
  func.func @transform_7(%arg0: i32, %arg1: i32) -> (i32, i32) {
    %c0_i32 = arith.constant 0 : i32
    %c0_i32_0 = arith.constant 0 : i32
    %c0_i32_1 = arith.constant 0 : i32
    return %c0_i32, %c0_i32_0 : i32, i32
  }
  func.func @transform_8(%arg0: i32, %arg1: i32) -> (i32, i32, i32) {
    %c0_i32 = arith.constant 0 : i32
    %c0_i32_0 = arith.constant 0 : i32
    return %arg0, %arg1, %c0_i32 : i32, i32, i32
  }
  func.func @transform_9(%arg0: i32, %arg1: i32) -> (i32, i32, i32) {
    %c0_i32 = arith.constant 0 : i32
    %c0_i32_0 = arith.constant 0 : i32
    return %arg0, %arg1, %c0_i32 : i32, i32, i32
  }
}

</mosaic_0001>

<llo_original>
// kernel: tpu_custom_call.1
$region0: #{tpu_custom_call.1}
  #allocation0 [shape = 'u32[]', space=smem, size = 0x4, offset = 0x4, fixed_abs, tag = 'smem constant byte address 0x4 - core index']
  #allocation1 [shape = 'u32[144,128]{1,0:T(1,128)}', space=vmem, size = 0x12000, scoped, tag = 'internal scratch']
  %s0 = inlined_call_operand.vmem [shape: f32[2,16,32], index: 0, kind: input, shape index: {}]
  %s1 = inlined_call_operand.vmem [shape: f32[2,16,8], index: 1, kind: input, shape index: {}]
  %s2 = inlined_call_operand.vmem [shape: f32[2,16,8], index: 2, kind: input, shape index: {}]
  %s3 = inlined_call_operand.vmem [shape: f32[2,16,16], index: 3, kind: input, shape index: {}]
  %s4 = inlined_call_operand.vmem [shape: f32[32,8], index: 4, kind: input, shape index: {}]
  %s5 = inlined_call_operand.vmem [shape: f32[1,8], index: 5, kind: input, shape index: {}]
  %s6 = inlined_call_operand.vmem [shape: f32[8,32], index: 6, kind: input, shape index: {}]
  %s7 = inlined_call_operand.vmem [shape: f32[1,32], index: 7, kind: input, shape index: {}]
  %s8 = inlined_call_operand.hbm [shape: f32[2,16,32], index: 8, kind: output, shape index: {0}]
  %s9 = inlined_call_operand.hbm [shape: f32[2,16,16], index: 9, kind: output, shape index: {1}]
  %10 = xla_tuple %s8, %s9
  %s11 = sld [smem:[#allocation0]]
  $region73: #{tpu_custom_call.1} parent=0
    _
  %s13 = ssub.s32 1, %s11
  %s14 = scalar_select 0, %s13, %s11
  $region1: #{tpu_custom_call.1} parent=0
    #allocation2 [shape = 'u8[16384]{0}', space=vmem, size = 0x4000, scoped, tag = 'output window, operand 0']
    #allocation3 [shape = 's32[2]{0}', space=sflag, size = 0x8, scoped, tag = 'scoped memory for tpu_custom_call.1']
    #allocation4 [shape = 'u8[16384]{0}', space=vmem, size = 0x4000, scoped, tag = 'output window, operand 1']
    #allocation5 [shape = 's32[2]{0}', space=sflag, size = 0x8, scoped, tag = 'scoped memory for tpu_custom_call.1']
    %15 = vsyncpa [#allocation3], 0
    %s16 = scalar_lea.sflag [#allocation3], 1
    %17 = vsyncpa %s16, 0
    %18 = vsyncpa [#allocation5], 0
    %s19 = scalar_lea.sflag [#allocation5], 1
    %20 = vsyncpa %s19, 0
    loop: start=0, step=1, limit=4
    $region2: #{tpu_custom_call.1} parent=1 // loop_pre_header
      _
    $region3: #{tpu_custom_call.1} parent=1 // loop_header
      %s22 = sphi 0, %s26
      %p23 = scmp.ge.s32.totalorder %s22, 4
      %s29 = sphi 0, %s41
      %s30 = sphi 0, %s37
      %s31 = sphi 0, %s29
      %s32 = sphi 0, %s30
      %s33 = sphi 0, %s31
      %s34 = sphi 0, %s32
      %s46 = sphi 0, %s48
      %s49 = sphi 0, %s46
      %s50 = sphi 0, %s49
      %s66 = sphi 0, %s50
      %s72 = sphi 0, %s74
      %s75 = sphi 0, %s72
      %s76 = sphi 0, %s75
      %s92 = sphi 0, %s76
      %s98 = sphi 0, %s100
      %s101 = sphi 0, %s98
      %s102 = sphi 0, %s101
      %s118 = sphi 0, %s102
      %s126 = sphi 0, %s128
      %s129 = sphi 0, %s126
      %s130 = sphi 0, %s129
      %s146 = sphi 0, %s130
      %s150 = sphi 0, %s150
      %s152 = sphi 0, %s150
      %s153 = sphi 0, %s152
      %s167 = sphi 0, %s153
      %s171 = sphi 0, %s171
      %s173 = sphi 0, %s171
      %s174 = sphi 0, %s173
      %s188 = sphi 0, %s174
      %s192 = sphi 0, %s192
      %s194 = sphi 0, %s192
      %s195 = sphi 0, %s194
      %s209 = sphi 0, %s195
      %s213 = sphi 0, %s213
      %s215 = sphi 0, %s213
      %s216 = sphi 0, %s215
      %s230 = sphi 0, %s216
      %s238 = sphi 0, %s240
      %s241 = sphi 0, %s238
      %s242 = sphi 0, %s241
      %s258 = sphi 0, %s242
      %s266 = sphi 0, %s268
      %s269 = sphi 0, %s266
      %s270 = sphi 0, %s269
      %s286 = sphi 0, %s270
    $region4: #{tpu_custom_call.1} parent=1 // loop_header_branch
      %25 = sbr.rel (%p23) target = $region8
    $region5: #{tpu_custom_call.1} parent=1 // loop_body
      %s27 = ssub.s32 %s22, 1
      %s28 = ssub.s32 %s22, 2
      %s35 = sadd.s32 1, %s30
      %p36 = scmp.ge.s32.totalorder %s35, 1
      %s37 = scalar_select %p36, 0, %s35
      %s38 = sadd.s32 1, %s29
      %s39 = scalar_select %p36, %s38, %s29
      %p40 = scmp.ge.s32.totalorder %s39, 2
      %s41 = scalar_select %p40, 0, %s39
      %s42 = ssub.s32 %s29, %s41
      %s43 = ssub.s32 %s30, %s37
      %s44 = sor.u32 %s42, %s43
      %p45 = scmp.eq.s32.totalorder %s44, 0
      %s47 = sadd.s32 %s46, 1
      %s48 = scalar_select %p45, %s46, %s47
      %p51 = pneg %p45
      %p52 = scmp.eq.s32.totalorder %s22, 1
      %p53 = por %p51, %p52
      %p54 = scmp.ne.s32.totalorder %s46, %s49
      %p55 = scmp.eq.s32.totalorder %s22, 0
      %p56 = por %p54, %p55
      %p57 = scmp.ne.s32.totalorder %s46, %s49
      %p58 = scmp.eq.s32.totalorder %s27, 1
      %p59 = por %p57, %p58
      %p60 = scmp.ne.s32.totalorder %s49, %s50
      %p61 = scmp.eq.s32.totalorder %s27, 0
      %p62 = por %p60, %p61
      %p63 = scmp.ne.s32.totalorder %s49, %s50
      %p64 = scmp.eq.s32.totalorder %s28, 1
      %p65 = por %p63, %p64
      %p67 = scmp.ne.s32.totalorder %s50, %s66
      %p68 = scmp.eq.s32.totalorder %s28, 0
      %p69 = por %p67, %p68
      %s70 = ssub.s32 %s29, %s41
      %p71 = scmp.eq.s32.totalorder %s70, 0
      %s73 = sadd.s32 %s72, 1
      %s74 = scalar_select %p71, %s72, %s73
      %p77 = pneg %p71
      %p78 = scmp.eq.s32.totalorder %s22, 1
      %p79 = por %p77, %p78
      %p80 = scmp.ne.s32.totalorder %s72, %s75
      %p81 = scmp.eq.s32.totalorder %s22, 0
      %p82 = por %p80, %p81
      %p83 = scmp.ne.s32.totalorder %s72, %s75
      %p84 = scmp.eq.s32.totalorder %s27, 1
      %p85 = por %p83, %p84
      %p86 = scmp.ne.s32.totalorder %s75, %s76
      %p87 = scmp.eq.s32.totalorder %s27, 0
      %p88 = por %p86, %p87
      %p89 = scmp.ne.s32.totalorder %s75, %s76
      %p90 = scmp.eq.s32.totalorder %s28, 1
      %p91 = por %p89, %p90
      %p93 = scmp.ne.s32.totalorder %s76, %s92
      %p94 = scmp.eq.s32.totalorder %s28, 0
      %p95 = por %p93, %p94
      %s96 = ssub.s32 %s29, %s41
      %p97 = scmp.eq.s32.totalorder %s96, 0
      %s99 = sadd.s32 %s98, 1
      %s100 = scalar_select %p97, %s98, %s99
      %p103 = pneg %p97
      %p104 = scmp.eq.s32.totalorder %s22, 1
      %p105 = por %p103, %p104
      %p106 = scmp.ne.s32.totalorder %s98, %s101
      %p107 = scmp.eq.s32.totalorder %s22, 0
      %p108 = por %p106, %p107
      %p109 = scmp.ne.s32.totalorder %s98, %s101
      %p110 = scmp.eq.s32.totalorder %s27, 1
      %p111 = por %p109, %p110
      %p112 = scmp.ne.s32.totalorder %s101, %s102
      %p113 = scmp.eq.s32.totalorder %s27, 0
      %p114 = por %p112, %p113
      %p115 = scmp.ne.s32.totalorder %s101, %s102
      %p116 = scmp.eq.s32.totalorder %s28, 1
      %p117 = por %p115, %p116
      %p119 = scmp.ne.s32.totalorder %s102, %s118
      %p120 = scmp.eq.s32.totalorder %s28, 0
      %p121 = por %p119, %p120
      %s122 = ssub.s32 %s29, %s41
      %s123 = ssub.s32 %s30, %s37
      %s124 = sor.u32 %s122, %s123
      %p125 = scmp.eq.s32.totalorder %s124, 0
      %s127 = sadd.s32 %s126, 1
      %s128 = scalar_select %p125, %s126, %s127
      %p131 = pneg %p125
      %p132 = scmp.eq.s32.totalorder %s22, 1
      %p133 = por %p131, %p132
      %p134 = scmp.ne.s32.totalorder %s126, %s129
      %p135 = scmp.eq.s32.totalorder %s22, 0
      %p136 = por %p134, %p135
      %p137 = scmp.ne.s32.totalorder %s126, %s129
      %p138 = scmp.eq.s32.totalorder %s27, 1
      %p139 = por %p137, %p138
      %p140 = scmp.ne.s32.totalorder %s129, %s130
      %p141 = scmp.eq.s32.totalorder %s27, 0
      %p142 = por %p140, %p141
      %p143 = scmp.ne.s32.totalorder %s129, %s130
      %p144 = scmp.eq.s32.totalorder %s28, 1
      %p145 = por %p143, %p144
      %p147 = scmp.ne.s32.totalorder %s130, %s146
      %p148 = scmp.eq.s32.totalorder %s28, 0
      %p149 = por %p147, %p148
      %s151 = sadd.s32 %s150, 1
      %p154 = scmp.eq.s32.totalorder %s22, 1
      %p155 = scmp.ne.s32.totalorder %s150, %s152
      %p156 = scmp.eq.s32.totalorder %s22, 0
      %p157 = por %p155, %p156
      %p158 = scmp.ne.s32.totalorder %s150, %s152
      %p159 = scmp.eq.s32.totalorder %s27, 1
      %p160 = por %p158, %p159
      %p161 = scmp.ne.s32.totalorder %s152, %s153
      %p162 = scmp.eq.s32.totalorder %s27, 0
      %p163 = por %p161, %p162
      %p164 = scmp.ne.s32.totalorder %s152, %s153
      %p165 = scmp.eq.s32.totalorder %s28, 1
      %p166 = por %p164, %p165
      %p168 = scmp.ne.s32.totalorder %s153, %s167
      %p169 = scmp.eq.s32.totalorder %s28, 0
      %p170 = por %p168, %p169
      %s172 = sadd.s32 %s171, 1
      %p175 = scmp.eq.s32.totalorder %s22, 1
      %p176 = scmp.ne.s32.totalorder %s171, %s173
      %p177 = scmp.eq.s32.totalorder %s22, 0
      %p178 = por %p176, %p177
      %p179 = scmp.ne.s32.totalorder %s171, %s173
      %p180 = scmp.eq.s32.totalorder %s27, 1
      %p181 = por %p179, %p180
      %p182 = scmp.ne.s32.totalorder %s173, %s174
      %p183 = scmp.eq.s32.totalorder %s27, 0
      %p184 = por %p182, %p183
      %p185 = scmp.ne.s32.totalorder %s173, %s174
      %p186 = scmp.eq.s32.totalorder %s28, 1
      %p187 = por %p185, %p186
      %p189 = scmp.ne.s32.totalorder %s174, %s188
      %p190 = scmp.eq.s32.totalorder %s28, 0
      %p191 = por %p189, %p190
      %s193 = sadd.s32 %s192, 1
      %p196 = scmp.eq.s32.totalorder %s22, 1
      %p197 = scmp.ne.s32.totalorder %s192, %s194
      %p198 = scmp.eq.s32.totalorder %s22, 0
      %p199 = por %p197, %p198
      %p200 = scmp.ne.s32.totalorder %s192, %s194
      %p201 = scmp.eq.s32.totalorder %s27, 1
      %p202 = por %p200, %p201
      %p203 = scmp.ne.s32.totalorder %s194, %s195
      %p204 = scmp.eq.s32.totalorder %s27, 0
      %p205 = por %p203, %p204
      %p206 = scmp.ne.s32.totalorder %s194, %s195
      %p207 = scmp.eq.s32.totalorder %s28, 1
      %p208 = por %p206, %p207
      %p210 = scmp.ne.s32.totalorder %s195, %s209
      %p211 = scmp.eq.s32.totalorder %s28, 0
      %p212 = por %p210, %p211
      %s214 = sadd.s32 %s213, 1
      %p217 = scmp.eq.s32.totalorder %s22, 1
      %p218 = scmp.ne.s32.totalorder %s213, %s215
      %p219 = scmp.eq.s32.totalorder %s22, 0
      %p220 = por %p218, %p219
      %p221 = scmp.ne.s32.totalorder %s213, %s215
      %p222 = scmp.eq.s32.totalorder %s27, 1
      %p223 = por %p221, %p222
      %p224 = scmp.ne.s32.totalorder %s215, %s216
      %p225 = scmp.eq.s32.totalorder %s27, 0
      %p226 = por %p224, %p225
      %p227 = scmp.ne.s32.totalorder %s215, %s216
      %p228 = scmp.eq.s32.totalorder %s28, 1
      %p229 = por %p227, %p228
      %p231 = scmp.ne.s32.totalorder %s216, %s230
      %p232 = scmp.eq.s32.totalorder %s28, 0
      %p233 = por %p231, %p232
      %s234 = ssub.s32 %s29, %s41
      %s235 = ssub.s32 %s30, %s37
      %s236 = sor.u32 %s234, %s235
      %p237 = scmp.eq.s32.totalorder %s236, 0
      %s239 = sadd.s32 %s238, 1
      %s240 = scalar_select %p237, %s238, %s239
      %p243 = pneg %p237
      %p244 = scmp.eq.s32.totalorder %s22, 1
      %p245 = por %p243, %p244
      %p246 = scmp.ne.s32.totalorder %s238, %s241
      %p247 = scmp.eq.s32.totalorder %s22, 0
      %p248 = por %p246, %p247
      %p249 = scmp.ne.s32.totalorder %s238, %s241
      %p250 = scmp.eq.s32.totalorder %s27, 1
      %p251 = por %p249, %p250
      %p252 = scmp.ne.s32.totalorder %s241, %s242
      %p253 = scmp.eq.s32.totalorder %s27, 0
      %p254 = por %p252, %p253
      %p255 = scmp.ne.s32.totalorder %s241, %s242
      %p256 = scmp.eq.s32.totalorder %s28, 1
      %p257 = por %p255, %p256
      %p259 = scmp.ne.s32.totalorder %s242, %s258
      %p260 = scmp.eq.s32.totalorder %s28, 0
      %p261 = por %p259, %p260
      %s262 = ssub.s32 %s29, %s41
      %s263 = ssub.s32 %s30, %s37
      %s264 = sor.u32 %s262, %s263
      %p265 = scmp.eq.s32.totalorder %s264, 0
      %s267 = sadd.s32 %s266, 1
      %s268 = scalar_select %p265, %s266, %s267
      %p271 = pneg %p265
      %p272 = scmp.eq.s32.totalorder %s22, 1
      %p273 = por %p271, %p272
      %p274 = scmp.ne.s32.totalorder %s266, %s269
      %p275 = scmp.eq.s32.totalorder %s22, 0
      %p276 = por %p274, %p275
      %p277 = scmp.ne.s32.totalorder %s266, %s269
      %p278 = scmp.eq.s32.totalorder %s27, 1
      %p279 = por %p277, %p278
      %p280 = scmp.ne.s32.totalorder %s269, %s270
      %p281 = scmp.eq.s32.totalorder %s27, 0
      %p282 = por %p280, %p281
      %p283 = scmp.ne.s32.totalorder %s269, %s270
      %p284 = scmp.eq.s32.totalorder %s28, 1
      %p285 = por %p283, %p284
      %p287 = scmp.ne.s32.totalorder %s270, %s286
      %p288 = scmp.eq.s32.totalorder %s28, 0
      %p289 = por %p287, %p288
      %p290 = scmp.le.s32.totalorder 1, %s22
      %p291 = scmp.lt.s32.totalorder %s22, 3
      %p292 = pnand %p290, %p291
      %p293 = pneg %p292
      // Predicated region
      $region9: #{tpu_custom_call.1} parent=5 // pred_check
        _
      $region10: #{tpu_custom_call.1} parent=5 // pred_check_branch
        %295 = sbr.rel (%p292) target = $region12
      $region11: #{tpu_custom_call.1} parent=5 // pred_region
        %s296 = ssub.s32 %s22, 1
        // Predicated region
        $region13: #{tpu_custom_call.1} parent=11 // pred_check
          %p297 = pneg %p163
        $region14: #{tpu_custom_call.1} parent=11 // pred_check_branch
          %299 = sbr.rel (%p297) target = $region16
        $region15: #{tpu_custom_call.1} parent=11 // pred_region
          _
        $region16: #{tpu_custom_call.1} parent=11 // pred_fallthru
          _
        // Predicated region
        $region17: #{tpu_custom_call.1} parent=11 // pred_check
          %p300 = pneg %p184
        $region18: #{tpu_custom_call.1} parent=11 // pred_check_branch
          %302 = sbr.rel (%p300) target = $region20
        $region19: #{tpu_custom_call.1} parent=11 // pred_region
          _
        $region20: #{tpu_custom_call.1} parent=11 // pred_fallthru
          _
        // Predicated region
        $region21: #{tpu_custom_call.1} parent=11 // pred_check
          %p303 = pneg %p205
        $region22: #{tpu_custom_call.1} parent=11 // pred_check_branch
          %305 = sbr.rel (%p303) target = $region24
        $region23: #{tpu_custom_call.1} parent=11 // pred_region
          _
        $region24: #{tpu_custom_call.1} parent=11 // pred_fallthru
          _
        // Predicated region
        $region25: #{tpu_custom_call.1} parent=11 // pred_check
          %p306 = pneg %p226
        $region26: #{tpu_custom_call.1} parent=11 // pred_check_branch
          %308 = sbr.rel (%p306) target = $region28
        $region27: #{tpu_custom_call.1} parent=11 // pred_region
          _
        $region28: #{tpu_custom_call.1} parent=11 // pred_fallthru
          _
      $region12: #{tpu_custom_call.1} parent=5 // pred_fallthru
        _
      %p309 = scmp.lt.s32.totalorder %s22, 2
      // Predicated region
      $region29: #{tpu_custom_call.1} parent=5 // pred_check
        %p310 = pneg %p309
      $region30: #{tpu_custom_call.1} parent=5 // pred_check_branch
        %312 = sbr.rel (%p310) target = $region32
      $region31: #{tpu_custom_call.1} parent=5 // pred_region
        // Predicated region
        $region33: #{tpu_custom_call.1} parent=31 // pred_check
          %p313 = pneg %p56
        $region34: #{tpu_custom_call.1} parent=31 // pred_check_branch
          %315 = sbr.rel (%p313) target = $region36
        $region35: #{tpu_custom_call.1} parent=31 // pred_region
          %s316 = smul.u32 2, %s30
          %p317 = scmp.lt.s32.totalorder %s29, 1
          %s318 = scalar_select %p317, %s29, 1
          %p319 = scmp.lt.s32.totalorder %s316, 1
          %s320 = scalar_select %p319, %s316, 1
          %s321 = smul.addr %s318, 2
          %s322 = sadd.s32 %s320, %s321
          %s323 = smul.addr %s322, 8
          %s324 = scalar_lea.vmem %s0, %s323
          %s325 = smul.u32 2, %s30
        $region36: #{tpu_custom_call.1} parent=31 // pred_fallthru
          _
        // Predicated region
        $region37: #{tpu_custom_call.1} parent=31 // pred_check
          %p326 = pneg %p82
        $region38: #{tpu_custom_call.1} parent=31 // pred_check_branch
          %328 = sbr.rel (%p326) target = $region40
        $region39: #{tpu_custom_call.1} parent=31 // pred_region
          %p329 = scmp.lt.s32.totalorder %s29, 1
          %s330 = scalar_select %p329, %s29, 1
          %s331 = smul.addr %s330, 2
          %s332 = smul.addr %s331, 8
          %s333 = scalar_lea.vmem %s1, %s332
        $region40: #{tpu_custom_call.1} parent=31 // pred_fallthru
          _
        // Predicated region
        $region41: #{tpu_custom_call.1} parent=31 // pred_check
          %p334 = pneg %p108
        $region42: #{tpu_custom_call.1} parent=31 // pred_check_branch
          %336 = sbr.rel (%p334) target = $region44
        $region43: #{tpu_custom_call.1} parent=31 // pred_region
          %p337 = scmp.lt.s32.totalorder %s29, 1
          %s338 = scalar_select %p337, %s29, 1
          %s339 = smul.addr %s338, 2
          %s340 = smul.addr %s339, 8
          %s341 = scalar_lea.vmem %s2, %s340
        $region44: #{tpu_custom_call.1} parent=31 // pred_fallthru
          _
        // Predicated region
        $region45: #{tpu_custom_call.1} parent=31 // pred_check
          %p342 = pneg %p136
        $region46: #{tpu_custom_call.1} parent=31 // pred_check_branch
          %344 = sbr.rel (%p342) target = $region48
        $region47: #{tpu_custom_call.1} parent=31 // pred_region
          %s345 = smul.u32 2, %s30
          %p346 = scmp.lt.s32.totalorder %s29, 1
          %s347 = scalar_select %p346, %s29, 1
          %p348 = scmp.lt.s32.totalorder %s345, 1
          %s349 = scalar_select %p348, %s345, 1
          %s350 = smul.addr %s347, 2
          %s351 = sadd.s32 %s349, %s350
          %s352 = smul.addr %s351, 8
          %s353 = scalar_lea.vmem %s3, %s352
          %s354 = smul.u32 2, %s30
        $region48: #{tpu_custom_call.1} parent=31 // pred_fallthru
          _
      $region32: #{tpu_custom_call.1} parent=5 // pred_fallthru
        _
      %p355 = scmp.le.s32.totalorder 1, %s22
      %p356 = scmp.lt.s32.totalorder %s22, 3
      %p357 = pnand %p355, %p356
      %p358 = pneg %p357
      // Predicated region
      $region49: #{tpu_custom_call.1} parent=5 // pred_check
        _
      $region50: #{tpu_custom_call.1} parent=5 // pred_check_branch
        %360 = sbr.rel (%p357) target = $region52
      $region51: #{tpu_custom_call.1} parent=5 // pred_region
        %s361 = ssub.s32 %s22, 1
        %s362 = smul.u32 2, %s32
        %p363 = scmp.lt.s32.totalorder %s31, 1
        %s364 = scalar_select %p363, %s31, 1
        %p365 = scmp.lt.s32.totalorder %s362, 1
        %s366 = scalar_select %p365, %s362, 1
        %s367 = smul.addr %s364, 2
        %s368 = sadd.s32 %s366, %s367
        %s369 = smul.addr %s368, 8
        %s370 = scalar_lea.vmem %s0, %s369
        %p371 = pneg %p62
        %p372 = pneg %p59
        %p373 = scmp.lt.s32.totalorder %s31, 1
        %s374 = scalar_select %p373, %s31, 1
        %s375 = smul.addr %s374, 2
        %s376 = smul.addr %s375, 8
        %s377 = scalar_lea.vmem %s1, %s376
        %p378 = pneg %p88
        %p379 = pneg %p85
        %p380 = scmp.lt.s32.totalorder %s31, 1
        %s381 = scalar_select %p380, %s31, 1
        %s382 = smul.addr %s381, 2
        %s383 = smul.addr %s382, 8
        %s384 = scalar_lea.vmem %s2, %s383
        %p385 = pneg %p114
        %p386 = pneg %p111
        %s387 = smul.u32 2, %s32
        %p388 = scmp.lt.s32.totalorder %s31, 1
        %s389 = scalar_select %p388, %s31, 1
        %p390 = scmp.lt.s32.totalorder %s387, 1
        %s391 = scalar_select %p390, %s387, 1
        %s392 = smul.addr %s389, 2
        %s393 = sadd.s32 %s391, %s392
        %s394 = smul.addr %s393, 8
        %s395 = scalar_lea.vmem %s3, %s394
        %p396 = pneg %p142
        %p397 = pneg %p139
        %p398 = pneg %p163
        %p399 = pneg %p160
        %p400 = pneg %p184
        %p401 = pneg %p181
        %p402 = pneg %p205
        %p403 = pneg %p202
        %p404 = pneg %p226
        %p405 = pneg %p223
        %p406 = pneg %p254
        %p407 = pneg %p251
        %s408 = sand.u32 %s241, 1
        %s409 = scalar_lea.sflag [#allocation3], %s408
        %s410 = sand.u32 %s241, 1
        %s411 = smul.addr %s410, 16
        %s412 = scalar_lea.vmem [#allocation2], %s411
        %p413 = pneg %p282
        %p414 = pneg %p279
        %s415 = sand.u32 %s269, 1
        %s416 = scalar_lea.sflag [#allocation5], %s415
        %s417 = sand.u32 %s269, 1
        %s418 = smul.addr %s417, 16
        %s419 = scalar_lea.vmem [#allocation4], %s418
        %s420 = smul.u32 2, %s32
        %p421 = scmp.lt.s32.totalorder %s31, 1
        %s422 = scalar_select %p421, %s31, 1
        %p423 = scmp.lt.s32.totalorder %s420, 1
        %s424 = scalar_select %p423, %s420, 1
        %s425 = smul.addr %s422, 2
        %s426 = sadd.s32 %s424, %s425
        %s427 = smul.addr %s426, 8
        %s428 = scalar_lea.vmem %s0, %s427
        %s429 = smul.u32 2, %s32
        %p430 = scmp.lt.s32.totalorder %s31, 1
        %s431 = scalar_select %p430, %s31, 1
        %s432 = smul.addr %s431, 2
        %s433 = smul.addr %s432, 8
        %s434 = scalar_lea.vmem %s1, %s433
        %p435 = scmp.lt.s32.totalorder %s31, 1
        %s436 = scalar_select %p435, %s31, 1
        %s437 = smul.addr %s436, 2
        %s438 = smul.addr %s437, 8
        %s439 = scalar_lea.vmem %s2, %s438
        %s440 = smul.u32 2, %s32
        %p441 = scmp.lt.s32.totalorder %s31, 1
        %s442 = scalar_select %p441, %s31, 1
        %p443 = scmp.lt.s32.totalorder %s440, 1
        %s444 = scalar_select %p443, %s440, 1
        %s445 = smul.addr %s442, 2
        %s446 = sadd.s32 %s444, %s445
        %s447 = smul.addr %s446, 8
        %s448 = scalar_lea.vmem %s3, %s447
        %s449 = smul.u32 2, %s32
        %s450 = smul.u32 2, %s32
        %s451 = smul.u32 2, %s32
        %v452 = vld [vmem:[%s428] sm:$0xff]
        %v453 = vld [vmem:[%s428 + $0x8] sm:$0xff]
        %v454 = vld [vmem:[%s4] sm:$0xff]
        %v455 = vld [vmem:[%s4 + $0x8] sm:$0xff]
        %v456 = vld [vmem:[%s4 + $0x10] sm:$0xff]
        %v457 = vld [vmem:[%s4 + $0x18] sm:$0xff]
        %v458 = vld [vmem:[%s5] sm:$0x1]
        %v460 = vlaneseq
        %v461 = vshrl.u32 %v460, 7
        %v462 = vsub.s32 0, %v461
        %v463 = vrot.slane %v458, %v462
        %vm465 = vcmask 261120
        %v467 = vsel %vm465, %v452, 0
        %v470 = vsel %vm465, %v453, 0
        %472 = vmatprep.subr.mxu0 0.0
        %473 = vmatpush1.msra.mxu0 %v454
        %474 = vmatprep.subr.mxu0 0.0
        %475 = vmatpush1.msra.mxu0 %v455
        %476 = vmatprep.subr.mxu0 0.0
        %477 = vmatpush1.msra.mxu0 %v456
        %478 = vmatprep.subr.mxu0 0.0
        %479 = vmatpush1.msra.mxu0 %v457
        %480 = vmatprep.subr.mxu0 0.0
        %481 = vmatpush1.msra.mxu0 0.0
        %482 = vmatprep.subr.mxu0 0.0
        %483 = vmatpush1.msra.mxu0 0.0
        %484 = vmatprep.subr.mxu0 0.0
        %485 = vmatpush1.msra.mxu0 0.0
        %486 = vmatprep.subr.mxu0 0.0
        %487 = vmatpush1.msra.mxu0 0.0
        %488 = vmatprep.subr.mxu0 0.0
        %489 = vmatpush1.msra.mxu0 0.0
        %490 = vmatprep.subr.mxu0 0.0
        %491 = vmatpush1.msra.mxu0 0.0
        %492 = vmatprep.subr.mxu0 0.0
        %493 = vmatpush1.msra.mxu0 0.0
        %494 = vmatprep.subr.mxu0 0.0
        %495 = vmatpush1.msra.mxu0 0.0
        %496 = vmatprep.subr.mxu0 0.0
        %497 = vmatpush1.msra.mxu0 0.0
        %498 = vmatprep.subr.mxu0 0.0
        %499 = vmatpush1.msra.mxu0 0.0
        %500 = vmatprep.subr.mxu0 0.0
        %501 = vmatpush1.msra.mxu0 0.0
        %502 = vmatprep.subr.mxu0 0.0
        %503 = vmatpush1.msra.mxu0 0.0
        %504 = vmatprep.subr.mxu0 0.0
        %505 = vmatpush1.msra.mxu0 0.0
        %506 = vmatprep.subr.mxu0 0.0
        %507 = vmatpush1.msra.mxu0 0.0
        %508 = vmatprep.subr.mxu0 0.0
        %509 = vmatpush1.msra.mxu0 0.0
        %510 = vmatprep.subr.mxu0 0.0
        %511 = vmatpush1.msra.mxu0 0.0
        %512 = vmatprep.subr.mxu0 0.0
        %513 = vmatpush1.msra.mxu0 0.0
        %514 = vmatprep.subr.mxu0 0.0
        %515 = vmatpush1.msra.mxu0 0.0
        %516 = vmatprep.subr.mxu0 0.0
        %517 = vmatpush1.msra.mxu0 0.0
        %518 = vmatprep.subr.mxu0 0.0
        %519 = vmatpush1.msra.mxu0 0.0
        %520 = vmatprep.subr.mxu0 0.0
        %521 = vmatpush1.msra.mxu0 0.0
        %522 = vmatprep.subr.mxu0 0.0
        %523 = vmatpush1.msra.mxu0 0.0
        %524 = vmatprep.subr.mxu0 0.0
        %525 = vmatpush1.msra.mxu0 0.0
        %526 = vmatprep.subr.mxu0 0.0
        %527 = vmatpush1.msra.mxu0 0.0
        %528 = vmatprep.subr.mxu0 0.0
        %529 = vmatpush1.msra.mxu0 0.0
        %530 = vmatprep.subr.mxu0 0.0
        %531 = vmatpush1.msra.mxu0 0.0
        %532 = vmatprep.subr.mxu0 0.0
        %533 = vmatpush1.msra.mxu0 0.0
        %534 = vmatprep.subr.mxu0 0.0
        %535 = vmatpush1.msra.mxu0 0.0
        %536 = vmatprep.mubr.f32.mxu0 0.0
        %537 = vmatmul.mubr.f32.gmra.mrb[0].mxu0 %v467
        %v538 = vpop.f32.mrb[0].mxu0
        %v539 = vadd.f32 %v463, %v538
        %v540 = vpop.f32.mrb[0].mxu0
        %541 = vmatprep.mubr.f32.mxu0 0.0
        %542 = vmatmul.mubr.f32.gmra.mrb[0].mxu0 %v470
        %v543 = vpop.f32.mrb[0].mxu0
        %v544 = vadd.f32 %v463, %v543
        %v545 = vpop.f32.mrb[0].mxu0
        %546 = vdwg.mxu0
        %v547 = vld [vmem:[%s434] sm:$0xff]
        %v548 = vld [vmem:[%s434 + $0x8] sm:$0xff]
        %vm549 = vcmask 64512
        %v551 = vsel %vm549, %v539, 0
        %v554 = vsel %vm549, %v544, 0
        %v557 = vsel %vm549, %v547, 0
        %v560 = vsel %vm549, %v548, 0
        %562 = vmatprep.subr.mxu0 0.0
        %563 = vmatpush1.xpose.msra.mxu0 %v557
        %564 = vmatprep.subr.mxu0 0.0
        %565 = vmatpush1.xpose.msra.mxu0 %v560
        %566 = vmatprep.subr.mxu0 0.0
        %567 = vmatpush1.xpose.msra.mxu0 0.0
        %568 = vmatprep.subr.mxu0 0.0
        %569 = vmatpush1.xpose.msra.mxu0 0.0
        %570 = vmatprep.subr.mxu0 0.0
        %571 = vmatpush1.xpose.msra.mxu0 0.0
        %572 = vmatprep.subr.mxu0 0.0
        %573 = vmatpush1.xpose.msra.mxu0 0.0
        %574 = vmatprep.subr.mxu0 0.0
        %575 = vmatpush1.xpose.msra.mxu0 0.0
        %576 = vmatprep.subr.mxu0 0.0
        %577 = vmatpush1.xpose.msra.mxu0 0.0
        %578 = vmatprep.subr.mxu0 0.0
        %579 = vmatpush1.xpose.msra.mxu0 0.0
        %580 = vmatprep.subr.mxu0 0.0
        %581 = vmatpush1.xpose.msra.mxu0 0.0
        %582 = vmatprep.subr.mxu0 0.0
        %583 = vmatpush1.xpose.msra.mxu0 0.0
        %584 = vmatprep.subr.mxu0 0.0
        %585 = vmatpush1.xpose.msra.mxu0 0.0
        %586 = vmatprep.subr.mxu0 0.0
        %587 = vmatpush1.xpose.msra.mxu0 0.0
        %588 = vmatprep.subr.mxu0 0.0
        %589 = vmatpush1.xpose.msra.mxu0 0.0
        %590 = vmatprep.subr.mxu0 0.0
        %591 = vmatpush1.xpose.msra.mxu0 0.0
        %592 = vmatprep.subr.mxu0 0.0
        %593 = vmatpush1.xpose.msra.mxu0 0.0
        %594 = vmatprep.subr.mxu0 0.0
        %595 = vmatpush1.xpose.msra.mxu0 0.0
        %596 = vmatprep.subr.mxu0 0.0
        %597 = vmatpush1.xpose.msra.mxu0 0.0
        %598 = vmatprep.subr.mxu0 0.0
        %599 = vmatpush1.xpose.msra.mxu0 0.0
        %600 = vmatprep.subr.mxu0 0.0
        %601 = vmatpush1.xpose.msra.mxu0 0.0
        %602 = vmatprep.subr.mxu0 0.0
        %603 = vmatpush1.xpose.msra.mxu0 0.0
        %604 = vmatprep.subr.mxu0 0.0
        %605 = vmatpush1.xpose.msra.mxu0 0.0
        %606 = vmatprep.subr.mxu0 0.0
        %607 = vmatpush1.xpose.msra.mxu0 0.0
        %608 = vmatprep.subr.mxu0 0.0
        %609 = vmatpush1.xpose.msra.mxu0 0.0
        %610 = vmatprep.subr.mxu0 0.0
        %611 = vmatpush1.xpose.msra.mxu0 0.0
        %612 = vmatprep.subr.mxu0 0.0
        %613 = vmatpush1.xpose.msra.mxu0 0.0
        %614 = vmatprep.subr.mxu0 0.0
        %615 = vmatpush1.xpose.msra.mxu0 0.0
        %616 = vmatprep.subr.mxu0 0.0
        %617 = vmatpush1.xpose.msra.mxu0 0.0
        %618 = vmatprep.subr.mxu0 0.0
        %619 = vmatpush1.xpose.msra.mxu0 0.0
        %620 = vmatprep.subr.mxu0 0.0
        %621 = vmatpush1.xpose.msra.mxu0 0.0
        %622 = vmatprep.subr.mxu0 0.0
        %623 = vmatpush1.xpose.msra.mxu0 0.0
        %624 = vmatprep.subr.mxu0 0.0
        %625 = vmatpush1.xpose.msra.mxu0 0.0
        %626 = vmatprep.mubr.f32.mxu0 0.0
        %627 = vmatmul.mubr.f32.gmra.mrb[0].mxu0 %v551
        %v628 = vpop.f32.mrb[0].mxu0
        %v629 = vadd.f32 0.0, %v628
        %v630 = vpop.f32.mrb[0].mxu0
        %631 = vmatprep.mubr.f32.mxu0 0.0
        %632 = vmatmul.mubr.f32.gmra.mrb[0].mxu0 %v554
        %v633 = vpop.f32.mrb[0].mxu0
        %v634 = vadd.f32 0.0, %v633
        %v635 = vpop.f32.mrb[0].mxu0
        %636 = vdwg.mxu0
        %v637 = vmul.f32 %v629, 0.35355338
        %v638 = vmul.f32 %v634, 0.35355338
        %v639 = vld [vmem:[%s448] sm:$0xff]
        %v640 = vld [vmem:[%s448 + $0x8] sm:$0xff]
        %v641 = vadd.f32 %v637, %v639
        %v642 = vadd.f32 %v638, %v640
        %vm643 = vcmask 130048
        %v644 = vsel %vm643, %v641, -inf
        %645 = vmax.xlane.f32.xlu0 %v644
        %v646 = vpop.xlane.xlu0 %645
        %v647 = vsel %vm643, %v642, -inf
        %648 = vmax.xlane.f32.xlu0 %v647
        %v649 = vpop.xlane.xlu0 %648
        %v650 = vsub.f32 %v641, %v646
        %v651 = vsub.f32 %v642, %v649
        %v652 = vmul.f32 %v650, 1.442695
        %v653 = vpow.pop %v652
        %v654 = vmul.f32 %v651, 1.442695
        %v655 = vpow.pop %v654
        %v656 = vsel %vm643, %v653, 0.0
        %657 = vadd.xlane.f32.xlu0 %v656
        %v658 = vpop.xlane.xlu0 %657
        %v659 = vsel %vm643, %v655, 0.0
        %660 = vadd.xlane.f32.xlu0 %v659
        %v661 = vpop.xlane.xlu0 %660
        %v662 = vrcp.pop %v658
        %v663 = vrcp.pop %v661
        %v664 = vmul.f32 %v653, %v662
        %v665 = vmul.f32 %v655, %v663
        %v666 = vld [vmem:[%s439] sm:$0xff]
        %v667 = vld [vmem:[%s439 + $0x8] sm:$0xff]
        %v669 = vsel %vm643, %v664, 0
        %v672 = vsel %vm643, %v665, 0
        %674 = vmatprep.subr.mxu0 0.0
        %675 = vmatpush1.msra.mxu0 %v666
        %676 = vmatprep.subr.mxu0 0.0
        %677 = vmatpush1.msra.mxu0 %v667
        %678 = vmatprep.subr.mxu0 0.0
        %679 = vmatpush1.msra.mxu0 0.0
        %680 = vmatprep.subr.mxu0 0.0
        %681 = vmatpush1.msra.mxu0 0.0
        %682 = vmatprep.subr.mxu0 0.0
        %683 = vmatpush1.msra.mxu0 0.0
        %684 = vmatprep.subr.mxu0 0.0
        %685 = vmatpush1.msra.mxu0 0.0
        %686 = vmatprep.subr.mxu0 0.0
        %687 = vmatpush1.msra.mxu0 0.0
        %688 = vmatprep.subr.mxu0 0.0
        %689 = vmatpush1.msra.mxu0 0.0
        %690 = vmatprep.subr.mxu0 0.0
        %691 = vmatpush1.msra.mxu0 0.0
        %692 = vmatprep.subr.mxu0 0.0
        %693 = vmatpush1.msra.mxu0 0.0
        %694 = vmatprep.subr.mxu0 0.0
        %695 = vmatpush1.msra.mxu0 0.0
        %696 = vmatprep.subr.mxu0 0.0
        %697 = vmatpush1.msra.mxu0 0.0
        %698 = vmatprep.subr.mxu0 0.0
        %699 = vmatpush1.msra.mxu0 0.0
        %700 = vmatprep.subr.mxu0 0.0
        %701 = vmatpush1.msra.mxu0 0.0
        %702 = vmatprep.subr.mxu0 0.0
        %703 = vmatpush1.msra.mxu0 0.0
        %704 = vmatprep.subr.mxu0 0.0
        %705 = vmatpush1.msra.mxu0 0.0
        %706 = vmatprep.subr.mxu0 0.0
        %707 = vmatpush1.msra.mxu0 0.0
        %708 = vmatprep.subr.mxu0 0.0
        %709 = vmatpush1.msra.mxu0 0.0
        %710 = vmatprep.subr.mxu0 0.0
        %711 = vmatpush1.msra.mxu0 0.0
        %712 = vmatprep.subr.mxu0 0.0
        %713 = vmatpush1.msra.mxu0 0.0
        %714 = vmatprep.subr.mxu0 0.0
        %715 = vmatpush1.msra.mxu0 0.0
        %716 = vmatprep.subr.mxu0 0.0
        %717 = vmatpush1.msra.mxu0 0.0
        %718 = vmatprep.subr.mxu0 0.0
        %719 = vmatpush1.msra.mxu0 0.0
        %720 = vmatprep.subr.mxu0 0.0
        %721 = vmatpush1.msra.mxu0 0.0
        %722 = vmatprep.subr.mxu0 0.0
        %723 = vmatpush1.msra.mxu0 0.0
        %724 = vmatprep.subr.mxu0 0.0
        %725 = vmatpush1.msra.mxu0 0.0
        %726 = vmatprep.subr.mxu0 0.0
        %727 = vmatpush1.msra.mxu0 0.0
        %728 = vmatprep.subr.mxu0 0.0
        %729 = vmatpush1.msra.mxu0 0.0
        %730 = vmatprep.subr.mxu0 0.0
        %731 = vmatpush1.msra.mxu0 0.0
        %732 = vmatprep.subr.mxu0 0.0
        %733 = vmatpush1.msra.mxu0 0.0
        %734 = vmatprep.subr.mxu0 0.0
        %735 = vmatpush1.msra.mxu0 0.0
        %736 = vmatprep.subr.mxu0 0.0
        %737 = vmatpush1.msra.mxu0 0.0
        %738 = vmatprep.mubr.f32.mxu0 0.0
        %739 = vmatmul.mubr.f32.gmra.mrb[0].mxu0 %v669
        %v740 = vpop.f32.mrb[0].mxu0
        %v741 = vadd.f32 0.0, %v740
        %v742 = vpop.f32.mrb[0].mxu0
        %743 = vmatprep.mubr.f32.mxu0 0.0
        %744 = vmatmul.mubr.f32.gmra.mrb[0].mxu0 %v672
        %v745 = vpop.f32.mrb[0].mxu0
        %v746 = vadd.f32 0.0, %v745
        %v747 = vpop.f32.mrb[0].mxu0
        %748 = vdwg.mxu0
        %v749 = vld [vmem:[%s6] sm:$0xff]
        %v750 = vld [vmem:[%s7] sm:$0x1]
        %v752 = vlaneseq
        %v753 = vshrl.u32 %v752, 7
        %v754 = vsub.s32 0, %v753
        %v755 = vrot.slane %v750, %v754
        %v758 = vsel %vm549, %v741, 0
        %v761 = vsel %vm549, %v746, 0
        %763 = vmatprep.subr.mxu0 0.0
        %764 = vmatpush1.msra.mxu0 %v749
        %765 = vmatprep.subr.mxu0 0.0
        %766 = vmatpush1.msra.mxu0 0.0
        %767 = vmatprep.subr.mxu0 0.0
        %768 = vmatpush1.msra.mxu0 0.0
        %769 = vmatprep.subr.mxu0 0.0
        %770 = vmatpush1.msra.mxu0 0.0
        %771 = vmatprep.subr.mxu0 0.0
        %772 = vmatpush1.msra.mxu0 0.0
        %773 = vmatprep.subr.mxu0 0.0
        %774 = vmatpush1.msra.mxu0 0.0
        %775 = vmatprep.subr.mxu0 0.0
        %776 = vmatpush1.msra.mxu0 0.0
        %777 = vmatprep.subr.mxu0 0.0
        %778 = vmatpush1.msra.mxu0 0.0
        %779 = vmatprep.subr.mxu0 0.0
        %780 = vmatpush1.msra.mxu0 0.0
        %781 = vmatprep.subr.mxu0 0.0
        %782 = vmatpush1.msra.mxu0 0.0
        %783 = vmatprep.subr.mxu0 0.0
        %784 = vmatpush1.msra.mxu0 0.0
        %785 = vmatprep.subr.mxu0 0.0
        %786 = vmatpush1.msra.mxu0 0.0
        %787 = vmatprep.subr.mxu0 0.0
        %788 = vmatpush1.msra.mxu0 0.0
        %789 = vmatprep.subr.mxu0 0.0
        %790 = vmatpush1.msra.mxu0 0.0
        %791 = vmatprep.subr.mxu0 0.0
        %792 = vmatpush1.msra.mxu0 0.0
        %793 = vmatprep.subr.mxu0 0.0
        %794 = vmatpush1.msra.mxu0 0.0
        %795 = vmatprep.subr.mxu0 0.0
        %796 = vmatpush1.msra.mxu0 0.0
        %797 = vmatprep.subr.mxu0 0.0
        %798 = vmatpush1.msra.mxu0 0.0
        %799 = vmatprep.subr.mxu0 0.0
        %800 = vmatpush1.msra.mxu0 0.0
        %801 = vmatprep.subr.mxu0 0.0
        %802 = vmatpush1.msra.mxu0 0.0
        %803 = vmatprep.subr.mxu0 0.0
        %804 = vmatpush1.msra.mxu0 0.0
        %805 = vmatprep.subr.mxu0 0.0
        %806 = vmatpush1.msra.mxu0 0.0
        %807 = vmatprep.subr.mxu0 0.0
        %808 = vmatpush1.msra.mxu0 0.0
        %809 = vmatprep.subr.mxu0 0.0
        %810 = vmatpush1.msra.mxu0 0.0
        %811 = vmatprep.subr.mxu0 0.0
        %812 = vmatpush1.msra.mxu0 0.0
        %813 = vmatprep.subr.mxu0 0.0
        %814 = vmatpush1.msra.mxu0 0.0
        %815 = vmatprep.subr.mxu0 0.0
        %816 = vmatpush1.msra.mxu0 0.0
        %817 = vmatprep.subr.mxu0 0.0
        %818 = vmatpush1.msra.mxu0 0.0
        %819 = vmatprep.subr.mxu0 0.0
        %820 = vmatpush1.msra.mxu0 0.0
        %821 = vmatprep.subr.mxu0 0.0
        %822 = vmatpush1.msra.mxu0 0.0
        %823 = vmatprep.subr.mxu0 0.0
        %824 = vmatpush1.msra.mxu0 0.0
        %825 = vmatprep.subr.mxu0 0.0
        %826 = vmatpush1.msra.mxu0 0.0
        %827 = vmatprep.mubr.f32.mxu0 0.0
        %828 = vmatmul.mubr.f32.gmra.mrb[0].mxu0 %v758
        %v829 = vpop.f32.mrb[0].mxu0
        %v830 = vadd.f32 %v755, %v829
        %v831 = vpop.f32.mrb[0].mxu0
        %832 = vmatprep.mubr.f32.mxu0 0.0
        %833 = vmatmul.mubr.f32.gmra.mrb[0].mxu0 %v761
        %v834 = vpop.f32.mrb[0].mxu0
        %v835 = vadd.f32 %v755, %v834
        %v836 = vpop.f32.mrb[0].mxu0
        %837 = vdwg.mxu0
        %838 = vst.msk [vmem:[%s412] sm:$0xff] %vm465, %v830
        %839 = vst.msk [vmem:[%s412 + $0x8] sm:$0xff] %vm465, %v835
        %840 = vst.msk [vmem:[%s419] sm:$0xff] %vm643, %v664
        %841 = vst.msk [vmem:[%s419 + $0x8] sm:$0xff] %vm643, %v665
        %s842 = sand.u32 %s241, 1
        %s843 = scalar_lea.sflag [#allocation3], %s842
        %s844 = sand.u32 %s241, 1
        %s845 = smul.addr %s844, 16
        %s846 = scalar_lea.vmem [#allocation2], %s845
        %s847 = sand.u32 %s269, 1
        %s848 = scalar_lea.sflag [#allocation5], %s847
        %s849 = sand.u32 %s269, 1
        %s850 = smul.addr %s849, 16
        %s851 = scalar_lea.vmem [#allocation4], %s850
        // Predicated region
        $region53: #{tpu_custom_call.1} parent=51 // pred_check
          %p852 = pneg %p251
        $region54: #{tpu_custom_call.1} parent=51 // pred_check_branch
          %854 = sbr.rel (%p852) target = $region56
        $region55: #{tpu_custom_call.1} parent=51 // pred_region
          %s855 = smul.u32 2, %s32
          %s857 = ssub.s32 256, 256
          %858 = vsyncadd %s843, %s857
          %s859 = smul.addr %s31, 2
          %s860 = sadd.s32 %s855, %s859
          %s861 = smul.addr %s860, 128
          %s862 = scalar_lea.hbm %s8, %s861
          %s863 = sshll.u32 %s846, 4
          %s864 = int_to_ptr.vmem [resolvable:$true] %s863
          %869 = dma.vmem_to_hbm [thread:$0]  %s864, 256, %s862, %s843, 128, 128, 8
        $region56: #{tpu_custom_call.1} parent=51 // pred_fallthru
          _
        // Predicated region
        $region57: #{tpu_custom_call.1} parent=51 // pred_check
          %p870 = pneg %p279
        $region58: #{tpu_custom_call.1} parent=51 // pred_check_branch
          %872 = sbr.rel (%p870) target = $region60
        $region59: #{tpu_custom_call.1} parent=51 // pred_region
          %s873 = smul.u32 2, %s32
          %s875 = ssub.s32 256, 256
          %876 = vsyncadd %s848, %s875
          %s877 = smul.addr %s31, 2
          %s878 = sadd.s32 %s873, %s877
          %s879 = smul.addr %s878, 128
          %s880 = scalar_lea.hbm %s9, %s879
          %s881 = sshll.u32 %s851, 4
          %s882 = int_to_ptr.vmem [resolvable:$true] %s881
          %887 = dma.vmem_to_hbm [thread:$0]  %s882, 256, %s880, %s848, 128, 128, 8
        $region60: #{tpu_custom_call.1} parent=51 // pred_fallthru
          _
      $region52: #{tpu_custom_call.1} parent=5 // pred_fallthru
        _
      %p888 = scmp.le.s32.totalorder 2, %s22
      // Predicated region
      $region61: #{tpu_custom_call.1} parent=5 // pred_check
        %p889 = pneg %p888
      $region62: #{tpu_custom_call.1} parent=5 // pred_check_branch
        %891 = sbr.rel (%p889) target = $region64
      $region63: #{tpu_custom_call.1} parent=5 // pred_region
        %s892 = ssub.s32 %s22, 2
        // Predicated region
        $region65: #{tpu_custom_call.1} parent=63 // pred_check
          %p893 = pneg %p257
        $region66: #{tpu_custom_call.1} parent=63 // pred_check_branch
          %895 = sbr.rel (%p893) target = $region68
        $region67: #{tpu_custom_call.1} parent=63 // pred_region
          %s896 = sand.u32 %s242, 1
          %s897 = scalar_lea.sflag [#allocation3], %s896
          %s898 = sand.u32 %s242, 1
          %s899 = smul.addr %s898, 16
          %s900 = scalar_lea.vmem [#allocation2], %s899
          %901 = dma.done %s897, 256
        $region68: #{tpu_custom_call.1} parent=63 // pred_fallthru
          _
        // Predicated region
        $region69: #{tpu_custom_call.1} parent=63 // pred_check
          %p902 = pneg %p285
        $region70: #{tpu_custom_call.1} parent=63 // pred_check_branch
          %904 = sbr.rel (%p902) target = $region72
        $region71: #{tpu_custom_call.1} parent=63 // pred_region
          %s905 = sand.u32 %s270, 1
          %s906 = scalar_lea.sflag [#allocation5], %s905
          %s907 = sand.u32 %s270, 1
          %s908 = smul.addr %s907, 16
          %s909 = scalar_lea.vmem [#allocation4], %s908
          %910 = dma.done %s906, 256
        $region72: #{tpu_custom_call.1} parent=63 // pred_fallthru
          _
      $region64: #{tpu_custom_call.1} parent=5 // pred_fallthru
        _
    $region6: #{tpu_custom_call.1} parent=1 // loop_footer
      %s26 = sadd.s32 1, %s22
    $region7: #{tpu_custom_call.1} parent=1 // loop_footer_branch
      %21 = sbr.rel target = $region3
    $region8: #{tpu_custom_call.1} parent=1 // loop_exit
      _
    %911 = vsyncpa [#allocation3], 1
    %s912 = scalar_lea.sflag [#allocation3], 1
    %913 = vsyncpa %s912, 1
    %914 = vsyncpa [#allocation5], 1
    %s915 = scalar_lea.sflag [#allocation5], 1
    %916 = vsyncpa %s915, 1

</llo_original>
